<compile_context>
chip_gen: v7x
topology: tpu7x:2x2x1
jax: 0.10.0
libtpu: 0.0.40
codegen_flags: <defaults>
</compile_context>

<pallas_src>
import numpy as np
import jax
import jax.numpy as jnp
from jax.experimental import pallas as pl
from jax.experimental.pallas import tpu as pltpu


# ----------------------------------------------------------------------------
# Resize weight matrices (torchvision/PIL antialiased bilinear == triangle
# filter with support scaled by the downscale factor; reduces to standard
# half-pixel bilinear when upscaling).
# ----------------------------------------------------------------------------
def _bilinear_aa_weights(in_size: int, out_size: int) -> np.ndarray:
    scale = in_size / out_size
    filterscale = max(scale, 1.0)
    support = 1.0 * filterscale  # triangle filter radius
    w_mat = np.zeros((out_size, in_size), dtype=np.float64)
    for i in range(out_size):
        center = (i + 0.5) * scale
        xmin = max(int(center - support + 0.5), 0)
        xmax = min(int(center + support + 0.5), in_size)
        xs = np.arange(xmin, xmax)
        w = np.clip(1.0 - np.abs((xs - center + 0.5) / filterscale), 0.0, None)
        s = w.sum()
        if s > 0:
            w = w / s
        w_mat[i, xs] = w
    return w_mat.astype(np.float32)


def _round_up(x: int, m: int) -> int:
    return ((x + m - 1) // m) * m


# ----------------------------------------------------------------------------
# Kernel: one batch element (all C channels) per grid step along axis 0,
# W-chunk reduction along grid axis 1.
#   out[p] accumulates  (Wh_crop @ plane[p][:, chunk]) @ WwT_crop[chunk, :]
# then normalizes at the last chunk.
# ----------------------------------------------------------------------------
def _make_kernel(num_channels: int):
    def kernel(img_ref, wh_ref, wwt_ref, mean_ref, inv_std_ref, out_ref, acc_ref):
        w_idx = pl.program_id(1)

        @pl.when(w_idx == 0)
        def _():
            acc_ref[...] = jnp.zeros_like(acc_ref)

        wh = wh_ref[...]    # (crop, Hp)  bf16, rows pre-cropped
        wwt = wwt_ref[...]  # (Wt, crop)  bf16, cols pre-cropped, W-chunk slice

        # Static (unrolled) loop over channels: amortizes per-step overhead and
        # keeps the shared weight tiles hot across C matmul pairs.
        for p in range(num_channels):
            plane = img_ref[0, p].astype(jnp.bfloat16)                    # (Hp, Wt)
            tmp = jnp.dot(wh, plane, preferred_element_type=jnp.float32)  # (crop, Wt) f32
            acc_ref[p] += jnp.dot(tmp.astype(jnp.bfloat16), wwt,
                                  preferred_element_type=jnp.float32)     # (crop, crop)

        @pl.when(w_idx == pl.num_programs(1) - 1)
        def _():
            # normalize in f32 with per-channel SMEM scalars, single store
            for p in range(num_channels):
                out_ref[0, p] = (acc_ref[p] - mean_ref[p]) * inv_std_ref[p]

    return kernel


def image_classification_preprocess(
    img: jax.Array,                 # (B, C, H, W) float32 in [0, 1]
    *,
    crop_size: int,
    resize_size: int = 256,
    normalize: bool = True,
    mean=(0.485, 0.456, 0.406),
    std=(0.229, 0.224, 0.225),
) -> jax.Array:
    B, C, H, W = img.shape
    assert img.dtype == jnp.float32

    # torchvision F.resize with a single int: shorter edge -> resize_size
    if H <= W:
        out_h = resize_size
        out_w = max(1, int(round(resize_size * W / H)))
    else:
        out_w = resize_size
        out_h = max(1, int(round(resize_size * H / W)))
    assert crop_size <= out_h and crop_size <= out_w, "crop larger than resized image"
    # TODO(synk): torchvision zero-pads when crop_size > resized size; not handled here.

    crop_top = int(round((out_h - crop_size) / 2.0))
    crop_left = int(round((out_w - crop_size) / 2.0))

    # ---- host-side weight construction: build, PRE-CROP, pad, cast to bf16 ----
    wh_full = _bilinear_aa_weights(H, out_h)                        # (out_h, H)
    ww_full = _bilinear_aa_weights(W, out_w)                        # (out_w, W)
    wh_c = wh_full[crop_top:crop_top + crop_size, :]                # (crop, H)
    ww_c = ww_full[crop_left:crop_left + crop_size, :]              # (crop, W)

    # Pad H to sublane multiple, W to lane/chunk multiple; padded weight columns
    # are zero so padded image pixels contribute nothing.
    MAX_W_BLOCK = 512
    Hp = _round_up(H, 8)
    Wp = _round_up(W, 128)
    if Wp <= MAX_W_BLOCK:
        Wt = Wp
    else:
        Wt = MAX_W_BLOCK
        Wp = _round_up(W, MAX_W_BLOCK)
    n_w = Wp // Wt

    wh_p = np.zeros((crop_size, Hp), dtype=np.float32)
    wh_p[:, :H] = wh_c
    ww_p = np.zeros((crop_size, Wp), dtype=np.float32)
    ww_p[:, :W] = ww_c

    wh = jnp.asarray(wh_p, dtype=jnp.bfloat16)            # (crop, Hp)
    wwt = jnp.asarray(ww_p.T, dtype=jnp.bfloat16)         # (Wp, crop)

    if normalize:
        mean_c = np.asarray(mean, dtype=np.float32)
        inv_std_c = 1.0 / np.asarray(std, dtype=np.float32)
    else:
        mean_c = np.zeros((C,), dtype=np.float32)
        inv_std_c = np.ones((C,), dtype=np.float32)
    assert mean_c.shape[0] == C and inv_std_c.shape[0] == C
    mean_a = jnp.asarray(mean_c)
    inv_std_a = jnp.asarray(inv_std_c)

    # Pad the image only if needed (zero weight columns keep the math exact).
    if Hp != H or Wp != W:
        img = jnp.pad(img, ((0, 0), (0, 0), (0, Hp - H), (0, Wp - W)))

    # VMEM budget: 2x double-buffered image block + weights + 2x output + scratch.
    img_blk = C * Hp * Wt * 4 * 2
    wh_blk = crop_size * Hp * 2 * 2
    wwt_blk = Wt * crop_size * 2 * 2
    out_blk = C * crop_size * crop_size * 4 * 2
    acc_blk = C * crop_size * crop_size * 4
    tmp_blk = crop_size * Wt * 4 * 4
    vmem_limit = int(min(max((img_blk + wh_blk + wwt_blk + out_blk + acc_blk + tmp_blk) * 1.3,
                             32 * 1024 * 1024),
                         64 * 1024 * 1024))

    kernel = _make_kernel(C)

    out = pl.pallas_call(
        kernel,
        out_shape=jax.ShapeDtypeStruct((B, C, crop_size, crop_size), jnp.float32),
        grid=(B, n_w),
        in_specs=[
            pl.BlockSpec((1, C, Hp, Wt), lambda b, w: (b, 0, 0, w)),   # image chunk
            pl.BlockSpec((crop_size, Hp), lambda b, w: (0, 0)),        # Wh (shared, pre-cropped)
            pl.BlockSpec((Wt, crop_size), lambda b, w: (w, 0)),        # Ww^T chunk (pre-cropped)
            pl.BlockSpec(memory_space=pltpu.MemorySpace.SMEM),         # per-channel mean
            pl.BlockSpec(memory_space=pltpu.MemorySpace.SMEM),         # per-channel 1/std
        ],
        out_specs=pl.BlockSpec((1, C, crop_size, crop_size), lambda b, w: (b, 0, 0, 0)),
        scratch_shapes=[pltpu.VMEM((C, crop_size, crop_size), jnp.float32)],
        compiler_params=pltpu.CompilerParams(
            dimension_semantics=("parallel", "arbitrary"),
            vmem_limit_bytes=vmem_limit,
        ),
    )(img, wh, wwt, mean_a, inv_std_a)

    return out


if __name__ == "__main__":
    key = jax.random.PRNGKey(0)
    B, C, H, W = 2, 3, 32, 32
    crop_size, resize_size = 16, 24

    img = jax.random.uniform(key, (B, C, H, W), dtype=jnp.float32)  # float in [0,1]

    out = image_classification_preprocess(
        img,
        crop_size=crop_size,
        resize_size=resize_size,
        normalize=True,
        mean=(0.485, 0.456, 0.406),
        std=(0.229, 0.224, 0.225),
    )
    out = jax.block_until_ready(out)
    assert out.shape == (B, C, crop_size, crop_size)
    assert out.dtype == jnp.float32
    print("KERNEL_OK")
</pallas_src>

<mosaic_0001>
module attributes {stable_mosaic.version = 11 : i64} {
  func.func @kernel(%arg0: i32, %arg1: i32, %arg2: memref<1x3x32x128xf32, #tpu.memory_space<vmem>>, %arg3: memref<16x32xbf16, #tpu.memory_space<vmem>>, %arg4: memref<128x16xbf16, #tpu.memory_space<vmem>>, %arg5: memref<3xf32, #tpu.memory_space<smem>>, %arg6: memref<3xf32, #tpu.memory_space<smem>>, %arg7: memref<1x3x16x16xf32, #tpu.memory_space<vmem>>, %arg8: memref<3x16x16xf32, #tpu.memory_space<vmem>>) attributes {dimension_semantics = [#tpu.dimension_semantics<parallel>, #tpu.dimension_semantics<arbitrary>], iteration_bounds = array<i64: 2, 1>, scalar_prefetch = 0 : i64, scratch_operands = 1 : i64, tpu.core_type = #tpu.core_type<tc>, window_params = [{transform_indices = @transform_0, window_bounds = array<i64: 1, 3, 32, 128>}, {pipeline_mode = #tpu.pipeline_mode<synchronous>, transform_indices = @transform_1, window_bounds = array<i64: 16, 32>}, {transform_indices = @transform_2, window_bounds = array<i64: 128, 16>}, {transform_indices = @transform_3, window_bounds = array<i64: 3>}, {transform_indices = @transform_4, window_bounds = array<i64: 3>}, {transform_indices = @transform_5, window_bounds = array<i64: 1, 3, 16, 16>}]} {
    %c0_i32 = arith.constant 0 : i32
    %0 = arith.cmpi eq, %arg1, %c0_i32 : i32
    %1 = arith.extui %0 : i1 to i32
    %c0_i32_0 = arith.constant 0 : i32
    %2 = arith.cmpi ne, %1, %c0_i32_0 : i32
    scf.if %2 {
      %cst_39 = arith.constant 0.000000e+00 : f32
      %44 = vector.broadcast %cst_39 : f32 to vector<3x16x16xf32>
      %c0_40 = arith.constant 0 : index
      %c0_41 = arith.constant 0 : index
      %c0_42 = arith.constant 0 : index
      %45 = vector.load %arg8[%c0_40, %c0_41, %c0_42] : memref<3x16x16xf32, #tpu.memory_space<vmem>>, vector<3x16x16xf32>
      tpu.vector_store %arg8[%c0_40, %c0_41, %c0_42], %44 {strides = array<i32>} : memref<3x16x16xf32, #tpu.memory_space<vmem>>, vector<3x16x16xf32>,
    } else {
    }
    %c0 = arith.constant 0 : index
    %c0_1 = arith.constant 0 : index
    %3 = vector.load %arg3[%c0, %c0_1] : memref<16x32xbf16, #tpu.memory_space<vmem>>, vector<16x32xbf16>
    %c0_2 = arith.constant 0 : index
    %c0_3 = arith.constant 0 : index
    %4 = vector.load %arg4[%c0_2, %c0_3] : memref<128x16xbf16, #tpu.memory_space<vmem>>, vector<128x16xbf16>
    %c0_4 = arith.constant 0 : index
    %c0_5 = arith.constant 0 : index
    %c0_6 = arith.constant 0 : index
    %c0_7 = arith.constant 0 : index
    %5 = vector.load %arg2[%c0_4, %c0_5, %c0_6, %c0_7] : memref<1x3x32x128xf32, #tpu.memory_space<vmem>>, vector<1x1x32x128xf32>
    %6 = vector.shape_cast %5 : vector<1x1x32x128xf32> to vector<32x128xf32>
    %7 = arith.truncf %6 : vector<32x128xf32> to vector<32x128xbf16>
    %cst = arith.constant dense<0.000000e+00> : vector<16x128xf32>
    %8 = tpu.matmul %3, %7, %cst {dimension_numbers = #tpu.dot_dimension_numbers<[1], [0], [0], [1], [0, 0, 1, 1], [], []>} : vector<16x32xbf16>, vector<32x128xbf16>, vector<16x128xf32> -> vector<16x128xf32>
    %c0_8 = arith.constant 0 : index
    %c0_9 = arith.constant 0 : index
    %c0_10 = arith.constant 0 : index
    %9 = vector.load %arg8[%c0_8, %c0_9, %c0_10] : memref<3x16x16xf32, #tpu.memory_space<vmem>>, vector<1x16x16xf32>
    %10 = vector.shape_cast %9 : vector<1x16x16xf32> to vector<16x16xf32>
    %11 = arith.truncf %8 : vector<16x128xf32> to vector<16x128xbf16>
    %cst_11 = arith.constant dense<0.000000e+00> : vector<16x16xf32>
    %12 = tpu.matmul %11, %4, %cst_11 {dimension_numbers = #tpu.dot_dimension_numbers<[1], [0], [0], [1], [0, 0, 1, 1], [], []>} : vector<16x128xbf16>, vector<128x16xbf16>, vector<16x16xf32> -> vector<16x16xf32>
    %13 = arith.addf %10, %12 : vector<16x16xf32>
    %c0_12 = arith.constant 0 : index
    %c0_13 = arith.constant 0 : index
    %c0_14 = arith.constant 0 : index
    %14 = vector.load %arg8[%c0_12, %c0_13, %c0_14] : memref<3x16x16xf32, #tpu.memory_space<vmem>>, vector<1x16x16xf32>
    %15 = vector.shape_cast %14 : vector<1x16x16xf32> to vector<16x16xf32>
    %16 = vector.shape_cast %13 : vector<16x16xf32> to vector<1x16x16xf32>
    tpu.vector_store %arg8[%c0_12, %c0_13, %c0_14], %16 {strides = array<i32>} : memref<3x16x16xf32, #tpu.memory_space<vmem>>, vector<1x16x16xf32>,
    %c0_15 = arith.constant 0 : index
    %c1 = arith.constant 1 : index
    %c0_16 = arith.constant 0 : index
    %c0_17 = arith.constant 0 : index
    %17 = vector.load %arg2[%c0_15, %c1, %c0_16, %c0_17] : memref<1x3x32x128xf32, #tpu.memory_space<vmem>>, vector<1x1x32x128xf32>
    %18 = vector.shape_cast %17 : vector<1x1x32x128xf32> to vector<32x128xf32>
    %19 = arith.truncf %18 : vector<32x128xf32> to vector<32x128xbf16>
    %cst_18 = arith.constant dense<0.000000e+00> : vector<16x128xf32>
    %20 = tpu.matmul %3, %19, %cst_18 {dimension_numbers = #tpu.dot_dimension_numbers<[1], [0], [0], [1], [0, 0, 1, 1], [], []>} : vector<16x32xbf16>, vector<32x128xbf16>, vector<16x128xf32> -> vector<16x128xf32>
    %c1_19 = arith.constant 1 : index
    %c0_20 = arith.constant 0 : index
    %c0_21 = arith.constant 0 : index
    %21 = vector.load %arg8[%c1_19, %c0_20, %c0_21] : memref<3x16x16xf32, #tpu.memory_space<vmem>>, vector<1x16x16xf32>
    %22 = vector.shape_cast %21 : vector<1x16x16xf32> to vector<16x16xf32>
    %23 = arith.truncf %20 : vector<16x128xf32> to vector<16x128xbf16>
    %cst_22 = arith.constant dense<0.000000e+00> : vector<16x16xf32>
    %24 = tpu.matmul %23, %4, %cst_22 {dimension_numbers = #tpu.dot_dimension_numbers<[1], [0], [0], [1], [0, 0, 1, 1], [], []>} : vector<16x128xbf16>, vector<128x16xbf16>, vector<16x16xf32> -> vector<16x16xf32>
    %25 = arith.addf %22, %24 : vector<16x16xf32>
    %c1_23 = arith.constant 1 : index
    %c0_24 = arith.constant 0 : index
    %c0_25 = arith.constant 0 : index
    %26 = vector.load %arg8[%c1_23, %c0_24, %c0_25] : memref<3x16x16xf32, #tpu.memory_space<vmem>>, vector<1x16x16xf32>
    %27 = vector.shape_cast %26 : vector<1x16x16xf32> to vector<16x16xf32>
    %28 = vector.shape_cast %25 : vector<16x16xf32> to vector<1x16x16xf32>
    tpu.vector_store %arg8[%c1_23, %c0_24, %c0_25], %28 {strides = array<i32>} : memref<3x16x16xf32, #tpu.memory_space<vmem>>, vector<1x16x16xf32>,
    %c0_26 = arith.constant 0 : index
    %c2 = arith.constant 2 : index
    %c0_27 = arith.constant 0 : index
    %c0_28 = arith.constant 0 : index
    %29 = vector.load %arg2[%c0_26, %c2, %c0_27, %c0_28] : memref<1x3x32x128xf32, #tpu.memory_space<vmem>>, vector<1x1x32x128xf32>
    %30 = vector.shape_cast %29 : vector<1x1x32x128xf32> to vector<32x128xf32>
    %31 = arith.truncf %30 : vector<32x128xf32> to vector<32x128xbf16>
    %cst_29 = arith.constant dense<0.000000e+00> : vector<16x128xf32>
    %32 = tpu.matmul %3, %31, %cst_29 {dimension_numbers = #tpu.dot_dimension_numbers<[1], [0], [0], [1], [0, 0, 1, 1], [], []>} : vector<16x32xbf16>, vector<32x128xbf16>, vector<16x128xf32> -> vector<16x128xf32>
    %c2_30 = arith.constant 2 : index
    %c0_31 = arith.constant 0 : index
    %c0_32 = arith.constant 0 : index
    %33 = vector.load %arg8[%c2_30, %c0_31, %c0_32] : memref<3x16x16xf32, #tpu.memory_space<vmem>>, vector<1x16x16xf32>
    %34 = vector.shape_cast %33 : vector<1x16x16xf32> to vector<16x16xf32>
    %35 = arith.truncf %32 : vector<16x128xf32> to vector<16x128xbf16>
    %cst_33 = arith.constant dense<0.000000e+00> : vector<16x16xf32>
    %36 = tpu.matmul %35, %4, %cst_33 {dimension_numbers = #tpu.dot_dimension_numbers<[1], [0], [0], [1], [0, 0, 1, 1], [], []>} : vector<16x128xbf16>, vector<128x16xbf16>, vector<16x16xf32> -> vector<16x16xf32>
    %37 = arith.addf %34, %36 : vector<16x16xf32>
    %c2_34 = arith.constant 2 : index
    %c0_35 = arith.constant 0 : index
    %c0_36 = arith.constant 0 : index
    %38 = vector.load %arg8[%c2_34, %c0_35, %c0_36] : memref<3x16x16xf32, #tpu.memory_space<vmem>>, vector<1x16x16xf32>
    %39 = vector.shape_cast %38 : vector<1x16x16xf32> to vector<16x16xf32>
    %40 = vector.shape_cast %37 : vector<16x16xf32> to vector<1x16x16xf32>
    tpu.vector_store %arg8[%c2_34, %c0_35, %c0_36], %40 {strides = array<i32>} : memref<3x16x16xf32, #tpu.memory_space<vmem>>, vector<1x16x16xf32>,
    %c0_i32_37 = arith.constant 0 : i32
    %41 = arith.cmpi eq, %arg1, %c0_i32_37 : i32
    %42 = arith.extui %41 : i1 to i32
    %c0_i32_38 = arith.constant 0 : i32
    %43 = arith.cmpi ne, %42, %c0_i32_38 : i32
    scf.if %43 {
      %c0_39 = arith.constant 0 : index
      %c0_40 = arith.constant 0 : index
      %c0_41 = arith.constant 0 : index
      %44 = vector.load %arg8[%c0_39, %c0_40, %c0_41] : memref<3x16x16xf32, #tpu.memory_space<vmem>>, vector<1x16x16xf32>
      %45 = vector.shape_cast %44 : vector<1x16x16xf32> to vector<16x16xf32>
      %c0_42 = arith.constant 0 : index
      %46 = memref.load %arg5[%c0_42] : memref<3xf32, #tpu.memory_space<smem>>
      %47 = vector.broadcast %46 : f32 to vector<16x16xf32>
      %48 = arith.subf %45, %47 : vector<16x16xf32>
      %c0_43 = arith.constant 0 : index
      %49 = memref.load %arg6[%c0_43] : memref<3xf32, #tpu.memory_space<smem>>
      %50 = vector.broadcast %49 : f32 to vector<16x16xf32>
      %51 = arith.mulf %48, %50 : vector<16x16xf32>
      %c0_44 = arith.constant 0 : index
      %c0_45 = arith.constant 0 : index
      %c0_46 = arith.constant 0 : index
      %c0_47 = arith.constant 0 : index
      %52 = vector.load %arg7[%c0_44, %c0_45, %c0_46, %c0_47] : memref<1x3x16x16xf32, #tpu.memory_space<vmem>>, vector<1x1x16x16xf32>
      %53 = vector.shape_cast %52 : vector<1x1x16x16xf32> to vector<16x16xf32>
      %54 = vector.shape_cast %51 : vector<16x16xf32> to vector<1x1x16x16xf32>
      tpu.vector_store %arg7[%c0_44, %c0_45, %c0_46, %c0_47], %54 {strides = array<i32>} : memref<1x3x16x16xf32, #tpu.memory_space<vmem>>, vector<1x1x16x16xf32>,
      %c1_48 = arith.constant 1 : index
      %c0_49 = arith.constant 0 : index
      %c0_50 = arith.constant 0 : index
      %55 = vector.load %arg8[%c1_48, %c0_49, %c0_50] : memref<3x16x16xf32, #tpu.memory_space<vmem>>, vector<1x16x16xf32>
      %56 = vector.shape_cast %55 : vector<1x16x16xf32> to vector<16x16xf32>
      %c1_51 = arith.constant 1 : index
      %57 = memref.load %arg5[%c1_51] : memref<3xf32, #tpu.memory_space<smem>>
      %58 = vector.broadcast %57 : f32 to vector<16x16xf32>
      %59 = arith.subf %56, %58 : vector<16x16xf32>
      %c1_52 = arith.constant 1 : index
      %60 = memref.load %arg6[%c1_52] : memref<3xf32, #tpu.memory_space<smem>>
      %61 = vector.broadcast %60 : f32 to vector<16x16xf32>
      %62 = arith.mulf %59, %61 : vector<16x16xf32>
      %c0_53 = arith.constant 0 : index
      %c1_54 = arith.constant 1 : index
      %c0_55 = arith.constant 0 : index
      %c0_56 = arith.constant 0 : index
      %63 = vector.load %arg7[%c0_53, %c1_54, %c0_55, %c0_56] : memref<1x3x16x16xf32, #tpu.memory_space<vmem>>, vector<1x1x16x16xf32>
      %64 = vector.shape_cast %63 : vector<1x1x16x16xf32> to vector<16x16xf32>
      %65 = vector.shape_cast %62 : vector<16x16xf32> to vector<1x1x16x16xf32>
      tpu.vector_store %arg7[%c0_53, %c1_54, %c0_55, %c0_56], %65 {strides = array<i32>} : memref<1x3x16x16xf32, #tpu.memory_space<vmem>>, vector<1x1x16x16xf32>,
      %c2_57 = arith.constant 2 : index
      %c0_58 = arith.constant 0 : index
      %c0_59 = arith.constant 0 : index
      %66 = vector.load %arg8[%c2_57, %c0_58, %c0_59] : memref<3x16x16xf32, #tpu.memory_space<vmem>>, vector<1x16x16xf32>
      %67 = vector.shape_cast %66 : vector<1x16x16xf32> to vector<16x16xf32>
      %c2_60 = arith.constant 2 : index
      %68 = memref.load %arg5[%c2_60] : memref<3xf32, #tpu.memory_space<smem>>
      %69 = vector.broadcast %68 : f32 to vector<16x16xf32>
      %70 = arith.subf %67, %69 : vector<16x16xf32>
      %c2_61 = arith.constant 2 : index
      %71 = memref.load %arg6[%c2_61] : memref<3xf32, #tpu.memory_space<smem>>
      %72 = vector.broadcast %71 : f32 to vector<16x16xf32>
      %73 = arith.mulf %70, %72 : vector<16x16xf32>
      %c0_62 = arith.constant 0 : index
      %c2_63 = arith.constant 2 : index
      %c0_64 = arith.constant 0 : index
      %c0_65 = arith.constant 0 : index
      %74 = vector.load %arg7[%c0_62, %c2_63, %c0_64, %c0_65] : memref<1x3x16x16xf32, #tpu.memory_space<vmem>>, vector<1x1x16x16xf32>
      %75 = vector.shape_cast %74 : vector<1x1x16x16xf32> to vector<16x16xf32>
      %76 = vector.shape_cast %73 : vector<16x16xf32> to vector<1x1x16x16xf32>
      tpu.vector_store %arg7[%c0_62, %c2_63, %c0_64, %c0_65], %76 {strides = array<i32>} : memref<1x3x16x16xf32, #tpu.memory_space<vmem>>, vector<1x1x16x16xf32>,
    } else {
    }
    return
  }
  func.func @transform_0(%arg0: i32, %arg1: i32) -> (i32, i32, i32, i32) {
    %c0_i32 = arith.constant 0 : i32
    %c0_i32_0 = arith.constant 0 : i32
    %c0_i32_1 = arith.constant 0 : i32
    return %arg0, %c0_i32, %c0_i32_0, %arg1 : i32, i32, i32, i32
  }
  func.func @transform_1(%arg0: i32, %arg1: i32) -> (i32, i32) {
    %c0_i32 = arith.constant 0 : i32
    %c0_i32_0 = arith.constant 0 : i32
    %c0_i32_1 = arith.constant 0 : i32
    return %c0_i32, %c0_i32_0 : i32, i32
  }
  func.func @transform_2(%arg0: i32, %arg1: i32) -> (i32, i32) {
    %c0_i32 = arith.constant 0 : i32
    %c0_i32_0 = arith.constant 0 : i32
    return %arg1, %c0_i32 : i32, i32
  }
  func.func @transform_3(%arg0: i32, %arg1: i32) -> i32 {
    %c0_i32 = arith.constant 0 : i32
    %c0_i32_0 = arith.constant 0 : i32
    return %c0_i32 : i32
  }
  func.func @transform_4(%arg0: i32, %arg1: i32) -> i32 {
    %c0_i32 = arith.constant 0 : i32
    %c0_i32_0 = arith.constant 0 : i32
    return %c0_i32 : i32
  }
  func.func @transform_5(%arg0: i32, %arg1: i32) -> (i32, i32, i32, i32) {
    %c0_i32 = arith.constant 0 : i32
    %c0_i32_0 = arith.constant 0 : i32
    %c0_i32_1 = arith.constant 0 : i32
    %c0_i32_2 = arith.constant 0 : i32
    return %arg0, %c0_i32, %c0_i32_0, %c0_i32_1 : i32, i32, i32, i32
  }
}

</mosaic_0001>

<llo_original>
// kernel: tpu_custom_call.1
$region0: #{tpu_custom_call.1}
  #allocation0 [shape = 'u32[]', space=smem, size = 0x4, offset = 0x4, fixed_abs, tag = 'smem constant byte address 0x4 - core index']
  #allocation1 [shape = 'u32[144,128]{1,0:T(1,128)}', space=vmem, size = 0x12000, scoped, tag = 'internal scratch']
  #allocation2 [shape = 'f32[3,16,16]{2,1,0:T(8,128)}', space=vmem, size = 0x6000, scoped, tag = 'scratch operand']
  %s0 = inlined_call_operand.hbm [shape: f32[2,3,32,128], index: 0, kind: input, shape index: {}]
  %s1 = inlined_call_operand.vmem [shape: bf16[16,32], index: 1, kind: input, shape index: {}]
  %s2 = inlined_call_operand.vmem [shape: bf16[128,16], index: 2, kind: input, shape index: {}]
  %s3 = inlined_call_operand.vmem [shape: f32[3], index: 3, kind: input, shape index: {}]
  %s4 = inlined_call_operand.vmem [shape: f32[3], index: 4, kind: input, shape index: {}]
  %s5 = inlined_call_operand.hbm [shape: f32[2,3,16,16], index: 5, kind: output, shape index: {}]
  %s6 = sld [smem:[#allocation0]]
  $region73: #{tpu_custom_call.1} parent=0
    _
  %s8 = ssub.s32 1, %s6
  %s9 = scalar_select 0, %s8, %s6
  $region1: #{tpu_custom_call.1} parent=0
    #allocation3 [shape = 'u8[98304]{0}', space=vmem, size = 0x18000, scoped, tag = 'input window, operand 0']
    #allocation4 [shape = 's32[2]{0}', space=sflag, size = 0x8, scoped, tag = 'scoped memory for tpu_custom_call.1']
    #allocation5 [shape = 's32[2]{0}', space=sflag, size = 0x8, scoped, tag = 'scoped memory for tpu_custom_call.1']
    #allocation6 [shape = 's32[2]{0}', space=sflag, size = 0x8, scoped, tag = 'scoped memory for tpu_custom_call.1']
    #allocation7 [shape = 'u8[512]{0}', space=smem, size = 0x200, scoped, tag = 'input window, operand 3, single buffered']
    #allocation8 [shape = 'u8[512]{0}', space=smem, size = 0x200, scoped, tag = 'input window, operand 4, single buffered']
    #allocation9 [shape = 's32[1]{0}', space=sflag, size = 0x4, scoped, tag = 'scoped memory for tpu_custom_call.1']
    #allocation10 [shape = 'u8[49152]{0}', space=vmem, size = 0xc000, scoped, tag = 'output window, operand 0']
    %10 = vsyncpa [#allocation4], 0
    %s11 = scalar_lea.sflag [#allocation4], 1
    %12 = vsyncpa %s11, 0
    %13 = vsyncpa [#allocation6], 0
    %14 = vsyncpa [#allocation9], 0
    %15 = vsyncpa [#allocation5], 0
    %s16 = scalar_lea.sflag [#allocation5], 1
    %17 = vsyncpa %s16, 0
    loop: start=0, step=1, limit=4
    $region2: #{tpu_custom_call.1} parent=1 // loop_pre_header
      _
    $region3: #{tpu_custom_call.1} parent=1 // loop_header
      %s19 = sphi 0, %s23
      %p20 = scmp.ge.s32.totalorder %s19, 4
      %s26 = sphi 0, %s38
      %s27 = sphi 0, %s34
      %s28 = sphi 0, %s26
      %s29 = sphi 0, %s27
      %s30 = sphi 0, %s28
      %s31 = sphi 0, %s29
      %s43 = sphi 0, %s45
      %s46 = sphi 0, %s43
      %s47 = sphi 0, %s46
      %s63 = sphi 0, %s47
      %s67 = sphi 0, %s67
      %s69 = sphi 0, %s67
      %s70 = sphi 0, %s69
      %s84 = sphi 0, %s70
      %s90 = sphi 0, %s92
      %s93 = sphi 0, %s90
      %s94 = sphi 0, %s93
      %s110 = sphi 0, %s94
      %s114 = sphi 0, %s114
      %s116 = sphi 0, %s114
      %s117 = sphi 0, %s116
      %s131 = sphi 0, %s117
      %s135 = sphi 0, %s135
      %s137 = sphi 0, %s135
      %s138 = sphi 0, %s137
      %s152 = sphi 0, %s138
      %s158 = sphi 0, %s160
      %s161 = sphi 0, %s158
      %s162 = sphi 0, %s161
      %s178 = sphi 0, %s162
    $region4: #{tpu_custom_call.1} parent=1 // loop_header_branch
      %22 = sbr.rel (%p20) target = $region8
    $region5: #{tpu_custom_call.1} parent=1 // loop_body
      %s24 = ssub.s32 %s19, 1
      %s25 = ssub.s32 %s19, 2
      %s32 = sadd.s32 1, %s27
      %p33 = scmp.ge.s32.totalorder %s32, 1
      %s34 = scalar_select %p33, 0, %s32
      %s35 = sadd.s32 1, %s26
      %s36 = scalar_select %p33, %s35, %s26
      %p37 = scmp.ge.s32.totalorder %s36, 2
      %s38 = scalar_select %p37, 0, %s36
      %s39 = ssub.s32 %s26, %s38
      %s40 = ssub.s32 %s27, %s34
      %s41 = sor.u32 %s39, %s40
      %p42 = scmp.eq.s32.totalorder %s41, 0
      %s44 = sadd.s32 %s43, 1
      %s45 = scalar_select %p42, %s43, %s44
      %p48 = pneg %p42
      %p49 = scmp.eq.s32.totalorder %s19, 1
      %p50 = por %p48, %p49
      %p51 = scmp.ne.s32.totalorder %s43, %s46
      %p52 = scmp.eq.s32.totalorder %s19, 0
      %p53 = por %p51, %p52
      %p54 = scmp.ne.s32.totalorder %s43, %s46
      %p55 = scmp.eq.s32.totalorder %s24, 1
      %p56 = por %p54, %p55
      %p57 = scmp.ne.s32.totalorder %s46, %s47
      %p58 = scmp.eq.s32.totalorder %s24, 0
      %p59 = por %p57, %p58
      %p60 = scmp.ne.s32.totalorder %s46, %s47
      %p61 = scmp.eq.s32.totalorder %s25, 1
      %p62 = por %p60, %p61
      %p64 = scmp.ne.s32.totalorder %s47, %s63
      %p65 = scmp.eq.s32.totalorder %s25, 0
      %p66 = por %p64, %p65
      %s68 = sadd.s32 %s67, 1
      %p71 = scmp.eq.s32.totalorder %s19, 1
      %p72 = scmp.ne.s32.totalorder %s67, %s69
      %p73 = scmp.eq.s32.totalorder %s19, 0
      %p74 = por %p72, %p73
      %p75 = scmp.ne.s32.totalorder %s67, %s69
      %p76 = scmp.eq.s32.totalorder %s24, 1
      %p77 = por %p75, %p76
      %p78 = scmp.ne.s32.totalorder %s69, %s70
      %p79 = scmp.eq.s32.totalorder %s24, 0
      %p80 = por %p78, %p79
      %p81 = scmp.ne.s32.totalorder %s69, %s70
      %p82 = scmp.eq.s32.totalorder %s25, 1
      %p83 = por %p81, %p82
      %p85 = scmp.ne.s32.totalorder %s70, %s84
      %p86 = scmp.eq.s32.totalorder %s25, 0
      %p87 = por %p85, %p86
      %s88 = ssub.s32 %s27, %s34
      %p89 = scmp.eq.s32.totalorder %s88, 0
      %s91 = sadd.s32 %s90, 1
      %s92 = scalar_select %p89, %s90, %s91
      %p95 = pneg %p89
      %p96 = scmp.eq.s32.totalorder %s19, 1
      %p97 = por %p95, %p96
      %p98 = scmp.ne.s32.totalorder %s90, %s93
      %p99 = scmp.eq.s32.totalorder %s19, 0
      %p100 = por %p98, %p99
      %p101 = scmp.ne.s32.totalorder %s90, %s93
      %p102 = scmp.eq.s32.totalorder %s24, 1
      %p103 = por %p101, %p102
      %p104 = scmp.ne.s32.totalorder %s93, %s94
      %p105 = scmp.eq.s32.totalorder %s24, 0
      %p106 = por %p104, %p105
      %p107 = scmp.ne.s32.totalorder %s93, %s94
      %p108 = scmp.eq.s32.totalorder %s25, 1
      %p109 = por %p107, %p108
      %p111 = scmp.ne.s32.totalorder %s94, %s110
      %p112 = scmp.eq.s32.totalorder %s25, 0
      %p113 = por %p111, %p112
      %s115 = sadd.s32 %s114, 1
      %p118 = scmp.eq.s32.totalorder %s19, 1
      %p119 = scmp.ne.s32.totalorder %s114, %s116
      %p120 = scmp.eq.s32.totalorder %s19, 0
      %p121 = por %p119, %p120
      %p122 = scmp.ne.s32.totalorder %s114, %s116
      %p123 = scmp.eq.s32.totalorder %s24, 1
      %p124 = por %p122, %p123
      %p125 = scmp.ne.s32.totalorder %s116, %s117
      %p126 = scmp.eq.s32.totalorder %s24, 0
      %p127 = por %p125, %p126
      %p128 = scmp.ne.s32.totalorder %s116, %s117
      %p129 = scmp.eq.s32.totalorder %s25, 1
      %p130 = por %p128, %p129
      %p132 = scmp.ne.s32.totalorder %s117, %s131
      %p133 = scmp.eq.s32.totalorder %s25, 0
      %p134 = por %p132, %p133
      %s136 = sadd.s32 %s135, 1
      %p139 = scmp.eq.s32.totalorder %s19, 1
      %p140 = scmp.ne.s32.totalorder %s135, %s137
      %p141 = scmp.eq.s32.totalorder %s19, 0
      %p142 = por %p140, %p141
      %p143 = scmp.ne.s32.totalorder %s135, %s137
      %p144 = scmp.eq.s32.totalorder %s24, 1
      %p145 = por %p143, %p144
      %p146 = scmp.ne.s32.totalorder %s137, %s138
      %p147 = scmp.eq.s32.totalorder %s24, 0
      %p148 = por %p146, %p147
      %p149 = scmp.ne.s32.totalorder %s137, %s138
      %p150 = scmp.eq.s32.totalorder %s25, 1
      %p151 = por %p149, %p150
      %p153 = scmp.ne.s32.totalorder %s138, %s152
      %p154 = scmp.eq.s32.totalorder %s25, 0
      %p155 = por %p153, %p154
      %s156 = ssub.s32 %s26, %s38
      %p157 = scmp.eq.s32.totalorder %s156, 0
      %s159 = sadd.s32 %s158, 1
      %s160 = scalar_select %p157, %s158, %s159
      %p163 = pneg %p157
      %p164 = scmp.eq.s32.totalorder %s19, 1
      %p165 = por %p163, %p164
      %p166 = scmp.ne.s32.totalorder %s158, %s161
      %p167 = scmp.eq.s32.totalorder %s19, 0
      %p168 = por %p166, %p167
      %p169 = scmp.ne.s32.totalorder %s158, %s161
      %p170 = scmp.eq.s32.totalorder %s24, 1
      %p171 = por %p169, %p170
      %p172 = scmp.ne.s32.totalorder %s161, %s162
      %p173 = scmp.eq.s32.totalorder %s24, 0
      %p174 = por %p172, %p173
      %p175 = scmp.ne.s32.totalorder %s161, %s162
      %p176 = scmp.eq.s32.totalorder %s25, 1
      %p177 = por %p175, %p176
      %p179 = scmp.ne.s32.totalorder %s162, %s178
      %p180 = scmp.eq.s32.totalorder %s25, 0
      %p181 = por %p179, %p180
      %p182 = scmp.le.s32.totalorder 1, %s19
      %p183 = scmp.lt.s32.totalorder %s19, 3
      %p184 = pnand %p182, %p183
      %p185 = pneg %p184
      // Predicated region
      $region9: #{tpu_custom_call.1} parent=5 // pred_check
        _
      $region10: #{tpu_custom_call.1} parent=5 // pred_check_branch
        %187 = sbr.rel (%p184) target = $region12
      $region11: #{tpu_custom_call.1} parent=5 // pred_region
        %s188 = ssub.s32 %s19, 1
        // Predicated region
        $region13: #{tpu_custom_call.1} parent=11 // pred_check
          %p189 = pneg %p80
        $region14: #{tpu_custom_call.1} parent=11 // pred_check_branch
          %191 = sbr.rel (%p189) target = $region16
        $region15: #{tpu_custom_call.1} parent=11 // pred_region
          _
        $region16: #{tpu_custom_call.1} parent=11 // pred_fallthru
          _
        // Predicated region
        $region17: #{tpu_custom_call.1} parent=11 // pred_check
          %p192 = pneg %p106
        $region18: #{tpu_custom_call.1} parent=11 // pred_check_branch
          %194 = sbr.rel (%p192) target = $region20
        $region19: #{tpu_custom_call.1} parent=11 // pred_region
          %s195 = smul.u32 16, %s29
          %p196 = scmp.lt.s32.totalorder %s195, 15
          %s197 = scalar_select %p196, %s195, 15
          %s198 = smul.addr %s197, 4
          %s199 = scalar_lea.vmem %s2, %s198
          %s200 = smul.u32 16, %s29
        $region20: #{tpu_custom_call.1} parent=11 // pred_fallthru
          _
        // Predicated region
        $region21: #{tpu_custom_call.1} parent=11 // pred_check
          %p201 = pneg %p127
        $region22: #{tpu_custom_call.1} parent=11 // pred_check_branch
          %203 = sbr.rel (%p201) target = $region24
        $region23: #{tpu_custom_call.1} parent=11 // pred_region
          %s205 = ssub.s32 16, 16
          %206 = vsyncadd [#allocation6], %s205
          %s208 = sshll.u32 %s3, 4
          %s209 = int_to_ptr.vmem [resolvable:$true] %s208
          %211 = dma.vmem_to_smem %s209, 16, [#allocation7], [#allocation6]
        $region24: #{tpu_custom_call.1} parent=11 // pred_fallthru
          _
        // Predicated region
        $region25: #{tpu_custom_call.1} parent=11 // pred_check
          %p212 = pneg %p148
        $region26: #{tpu_custom_call.1} parent=11 // pred_check_branch
          %214 = sbr.rel (%p212) target = $region28
        $region27: #{tpu_custom_call.1} parent=11 // pred_region
          %s216 = ssub.s32 16, 16
          %217 = vsyncadd [#allocation9], %s216
          %s219 = sshll.u32 %s4, 4
          %s220 = int_to_ptr.vmem [resolvable:$true] %s219
          %222 = dma.vmem_to_smem %s220, 16, [#allocation8], [#allocation9]
        $region28: #{tpu_custom_call.1} parent=11 // pred_fallthru
          _
      $region12: #{tpu_custom_call.1} parent=5 // pred_fallthru
        _
      %p223 = scmp.lt.s32.totalorder %s19, 2
      // Predicated region
      $region29: #{tpu_custom_call.1} parent=5 // pred_check
        %p224 = pneg %p223
      $region30: #{tpu_custom_call.1} parent=5 // pred_check_branch
        %226 = sbr.rel (%p224) target = $region32
      $region31: #{tpu_custom_call.1} parent=5 // pred_region
        // Predicated region
        $region33: #{tpu_custom_call.1} parent=31 // pred_check
          %p227 = pneg %p53
        $region34: #{tpu_custom_call.1} parent=31 // pred_check_branch
          %229 = sbr.rel (%p227) target = $region36
        $region35: #{tpu_custom_call.1} parent=31 // pred_region
          %s230 = sand.u32 %s43, 1
          %s231 = scalar_lea.sflag [#allocation4], %s230
          %s232 = sand.u32 %s43, 1
          %s233 = smul.addr %s232, 96
          %s234 = scalar_lea.vmem [#allocation3], %s233
          %s236 = ssub.s32 1536, 1536
          %237 = vsyncadd %s231, %s236
          %s238 = smul.addr %s26, 12
          %s239 = sadd.s32 %s27, %s238
          %s240 = smul.addr %s239, 128
          %s241 = scalar_lea.hbm %s0, %s240
          %s242 = sshll.u32 %s234, 4
          %s243 = int_to_ptr.vmem [resolvable:$true] %s242
          %248 = dma.hbm_to_vmem [thread:$0]  %s241, 1536, %s243, %s231, 128, 128, 8
        $region36: #{tpu_custom_call.1} parent=31 // pred_fallthru
          _
      $region32: #{tpu_custom_call.1} parent=5 // pred_fallthru
        _
      %p249 = scmp.le.s32.totalorder 1, %s19
      %p250 = scmp.lt.s32.totalorder %s19, 3
      %p251 = pnand %p249, %p250
      %p252 = pneg %p251
      // Predicated region
      $region37: #{tpu_custom_call.1} parent=5 // pred_check
        _
      $region38: #{tpu_custom_call.1} parent=5 // pred_check_branch
        %254 = sbr.rel (%p251) target = $region40
      $region39: #{tpu_custom_call.1} parent=5 // pred_region
        %s255 = ssub.s32 %s19, 1
        %s256 = sand.u32 %s46, 1
        %s257 = scalar_lea.sflag [#allocation4], %s256
        %s258 = sand.u32 %s46, 1
        %s259 = smul.addr %s258, 96
        %s260 = scalar_lea.vmem [#allocation3], %s259
        // Predicated region
        $region41: #{tpu_custom_call.1} parent=39 // pred_check
          %p261 = pneg %p59
        $region42: #{tpu_custom_call.1} parent=39 // pred_check_branch
          %263 = sbr.rel (%p261) target = $region44
        $region43: #{tpu_custom_call.1} parent=39 // pred_region
          %264 = dma.done %s257, 1536
        $region44: #{tpu_custom_call.1} parent=39 // pred_fallthru
          _
        // Predicated region
        $region45: #{tpu_custom_call.1} parent=39 // pred_check
          %p265 = pneg %p127
        $region46: #{tpu_custom_call.1} parent=39 // pred_check_branch
          %267 = sbr.rel (%p265) target = $region48
        $region47: #{tpu_custom_call.1} parent=39 // pred_region
          %268 = dma.done [#allocation6], 16
        $region48: #{tpu_custom_call.1} parent=39 // pred_fallthru
          _
        // Predicated region
        $region49: #{tpu_custom_call.1} parent=39 // pred_check
          %p269 = pneg %p148
        $region50: #{tpu_custom_call.1} parent=39 // pred_check_branch
          %271 = sbr.rel (%p269) target = $region52
        $region51: #{tpu_custom_call.1} parent=39 // pred_region
          %272 = dma.done [#allocation9], 16
        $region52: #{tpu_custom_call.1} parent=39 // pred_fallthru
          _
        %273 = sfence
        %s274 = sand.u32 %s46, 1
        %s275 = scalar_lea.sflag [#allocation4], %s274
        %s276 = sand.u32 %s46, 1
        %s277 = smul.addr %s276, 96
        %s278 = scalar_lea.vmem [#allocation3], %s277
        %p279 = pneg %p59
        %p280 = pneg %p56
        %p281 = pneg %p80
        %p282 = pneg %p77
        %s283 = smul.u32 16, %s29
        %p284 = scmp.lt.s32.totalorder %s283, 15
        %s285 = scalar_select %p284, %s283, 15
        %s286 = smul.addr %s285, 4
        %s287 = scalar_lea.vmem %s2, %s286
        %p288 = pneg %p106
        %p289 = pneg %p103
        %p290 = pneg %p127
        %p291 = pneg %p124
        %p292 = pneg %p148
        %p293 = pneg %p145
        %p294 = pneg %p174
        %p295 = pneg %p171
        %s296 = sand.u32 %s161, 1
        %s297 = scalar_lea.sflag [#allocation5], %s296
        %s298 = sand.u32 %s161, 1
        %s299 = smul.addr %s298, 48
        %s300 = scalar_lea.vmem [#allocation10], %s299
        %s301 = smul.u32 16, %s29
        %p302 = scmp.lt.s32.totalorder %s301, 15
        %s303 = scalar_select %p302, %s301, 15
        %s304 = smul.addr %s303, 4
        %s305 = scalar_lea.vmem %s2, %s304
        %s306 = smul.u32 16, %s29
        %p308 = scmp.eq.s32.totalorder %s29, 0
        // Predicated region
        $region53: #{tpu_custom_call.1} parent=39 // pred_check
          %p309 = pneg %p308
        $region54: #{tpu_custom_call.1} parent=39 // pred_check_branch
          %311 = sbr.rel (%p309) target = $region56
        $region55: #{tpu_custom_call.1} parent=39 // pred_region
          %vm312 = vcmask 130048
          %313 = vst.msk [vmem:[#allocation2] sm:$0xff] %vm312, 0.0
          %314 = vst.msk [vmem:[#allocation2 + $0x8] sm:$0xff] %vm312, 0.0
          %315 = vst.msk [vmem:[#allocation2 + $0x10] sm:$0xff] %vm312, 0.0
          %316 = vst.msk [vmem:[#allocation2 + $0x18] sm:$0xff] %vm312, 0.0
          %317 = vst.msk [vmem:[#allocation2 + $0x20] sm:$0xff] %vm312, 0.0
          %318 = vst.msk [vmem:[#allocation2 + $0x28] sm:$0xff] %vm312, 0.0
        $region56: #{tpu_custom_call.1} parent=39 // pred_fallthru
          _
        %v319 = vld [vmem:[%s1] sm:$0xf]
        %v320 = vld [vmem:[%s1 + $0x4] sm:$0xf]
        %v321 = vld [vmem:[%s305] sm:$0xf]
        %v322 = vld [vmem:[%s305 + $0x4] sm:$0xf]
        %v323 = vld [vmem:[%s305 + $0x8] sm:$0xf]
        %v324 = vld [vmem:[%s305 + $0xc] sm:$0xf]
        %v325 = vld [vmem:[%s305 + $0x10] sm:$0xf]
        %v326 = vld [vmem:[%s305 + $0x14] sm:$0xf]
        %v327 = vld [vmem:[%s305 + $0x18] sm:$0xf]
        %v328 = vld [vmem:[%s305 + $0x1c] sm:$0xf]
        %v329 = vld [vmem:[%s305 + $0x20] sm:$0xf]
        %v330 = vld [vmem:[%s305 + $0x24] sm:$0xf]
        %v331 = vld [vmem:[%s305 + $0x28] sm:$0xf]
        %v332 = vld [vmem:[%s305 + $0x2c] sm:$0xf]
        %v333 = vld [vmem:[%s305 + $0x30] sm:$0xf]
        %v334 = vld [vmem:[%s305 + $0x34] sm:$0xf]
        %v335 = vld [vmem:[%s305 + $0x38] sm:$0xf]
        %v336 = vld [vmem:[%s305 + $0x3c] sm:$0xf]
        %v337 = vld [vmem:[%s260] sm:$0xff]
        %v338 = vld [vmem:[%s260 + $0x8] sm:$0xff]
        %v339 = vld [vmem:[%s260 + $0x10] sm:$0xff]
        %v340 = vld [vmem:[%s260 + $0x18] sm:$0xff]
        %v341 = vpack.c.bf16 %v338, %v337
        %v342 = vpack.c.bf16 %v340, %v339
        %v345 = vunpack.c.l.b16 %v319
        %v346 = vunpack.c.l.b16 %v320
        %v347 = vpack.c.b16 %v346, %v345
        %vm348 = vcmask 261120
        %v350 = vsel %vm348, %v347, 0
        %352 = vmatprep.subr.bf16.mxu0 0
        %353 = vmatpush1.bf16.msra.mxu0 %v341
        %354 = vmatprep.subr.bf16.mxu0 0
        %355 = vmatpush1.bf16.msra.mxu0 %v342
        %356 = vmatprep.subr.bf16.mxu0 0
        %357 = vmatpush1.bf16.msra.mxu0 0
        %358 = vmatprep.subr.bf16.mxu0 0
        %359 = vmatpush1.bf16.msra.mxu0 0
        %360 = vmatprep.subr.bf16.mxu0 0
        %361 = vmatpush1.bf16.msra.mxu0 0
        %362 = vmatprep.subr.bf16.mxu0 0
        %363 = vmatpush1.bf16.msra.mxu0 0
        %364 = vmatprep.subr.bf16.mxu0 0
        %365 = vmatpush1.bf16.msra.mxu0 0
        %366 = vmatprep.subr.bf16.mxu0 0
        %367 = vmatpush1.bf16.msra.mxu0 0
        %368 = vmatprep.subr.bf16.mxu0 0
        %369 = vmatpush1.bf16.msra.mxu0 0
        %370 = vmatprep.subr.bf16.mxu0 0
        %371 = vmatpush1.bf16.msra.mxu0 0
        %372 = vmatprep.subr.bf16.mxu0 0
        %373 = vmatpush1.bf16.msra.mxu0 0
        %374 = vmatprep.subr.bf16.mxu0 0
        %375 = vmatpush1.bf16.msra.mxu0 0
        %376 = vmatprep.subr.bf16.mxu0 0
        %377 = vmatpush1.bf16.msra.mxu0 0
        %378 = vmatprep.subr.bf16.mxu0 0
        %379 = vmatpush1.bf16.msra.mxu0 0
        %380 = vmatprep.subr.bf16.mxu0 0
        %381 = vmatpush1.bf16.msra.mxu0 0
        %382 = vmatprep.subr.bf16.mxu0 0
        %383 = vmatpush1.bf16.msra.mxu0 0
        %384 = vmatprep.mubr.bf16.mxu0 0
        %385 = vmatmul.mubr.bf16.gmra.mrb[0].mxu0 %v350
        %v386 = vpop.f32.mrb[0].mxu0
        %v387 = vadd.f32 0.0, %v386
        %v388 = vpop.f32.mrb[0].mxu0
        %v389 = vpop.f32.mrb[0].mxu0
        %v390 = vadd.f32 0.0, %v389
        %v391 = vpop.f32.mrb[0].mxu0
        %392 = vdwg.mxu0
        %v393 = vld [vmem:[#allocation2] sm:$0xff]
        %v394 = vld [vmem:[#allocation2 + $0x8] sm:$0xff]
        %v395 = vpack.c.bf16 %v390, %v387
        %v412 = vunpack.c.l.b16 %v321
        %v413 = vunpack.c.l.b16 %v322
        %v414 = vunpack.c.l.b16 %v323
        %v415 = vunpack.c.l.b16 %v324
        %v416 = vunpack.c.l.b16 %v325
        %v417 = vunpack.c.l.b16 %v326
        %v418 = vunpack.c.l.b16 %v327
        %v419 = vunpack.c.l.b16 %v328
        %v420 = vunpack.c.l.b16 %v329
        %v421 = vunpack.c.l.b16 %v330
        %v422 = vunpack.c.l.b16 %v331
        %v423 = vunpack.c.l.b16 %v332
        %v424 = vunpack.c.l.b16 %v333
        %v425 = vunpack.c.l.b16 %v334
        %v426 = vunpack.c.l.b16 %v335
        %v427 = vunpack.c.l.b16 %v336
        %v428 = vpack.c.b16 %v413, %v412
        %v429 = vpack.c.b16 %v415, %v414
        %v430 = vpack.c.b16 %v417, %v416
        %v431 = vpack.c.b16 %v419, %v418
        %v432 = vpack.c.b16 %v421, %v420
        %v433 = vpack.c.b16 %v423, %v422
        %v434 = vpack.c.b16 %v425, %v424
        %v435 = vpack.c.b16 %v427, %v426
        %444 = vmatprep.subr.bf16.mxu0 0
        %445 = vmatpush1.bf16.msra.mxu0 %v428
        %446 = vmatprep.subr.bf16.mxu0 0
        %447 = vmatpush1.bf16.msra.mxu0 %v429
        %448 = vmatprep.subr.bf16.mxu0 0
        %449 = vmatpush1.bf16.msra.mxu0 %v430
        %450 = vmatprep.subr.bf16.mxu0 0
        %451 = vmatpush1.bf16.msra.mxu0 %v431
        %452 = vmatprep.subr.bf16.mxu0 0
        %453 = vmatpush1.bf16.msra.mxu0 %v432
        %454 = vmatprep.subr.bf16.mxu0 0
        %455 = vmatpush1.bf16.msra.mxu0 %v433
        %456 = vmatprep.subr.bf16.mxu0 0
        %457 = vmatpush1.bf16.msra.mxu0 %v434
        %458 = vmatprep.subr.bf16.mxu0 0
        %459 = vmatpush1.bf16.msra.mxu0 %v435
        %460 = vmatprep.subr.bf16.mxu0 0
        %461 = vmatpush1.bf16.msra.mxu0 0
        %462 = vmatprep.subr.bf16.mxu0 0
        %463 = vmatpush1.bf16.msra.mxu0 0
        %464 = vmatprep.subr.bf16.mxu0 0
        %465 = vmatpush1.bf16.msra.mxu0 0
        %466 = vmatprep.subr.bf16.mxu0 0
        %467 = vmatpush1.bf16.msra.mxu0 0
        %468 = vmatprep.subr.bf16.mxu0 0
        %469 = vmatpush1.bf16.msra.mxu0 0
        %470 = vmatprep.subr.bf16.mxu0 0
        %471 = vmatpush1.bf16.msra.mxu0 0
        %472 = vmatprep.subr.bf16.mxu0 0
        %473 = vmatpush1.bf16.msra.mxu0 0
        %474 = vmatprep.subr.bf16.mxu0 0
        %475 = vmatpush1.bf16.msra.mxu0 0
        %476 = vmatprep.mubr.bf16.mxu0 0
        %477 = vmatmul.mubr.bf16.gmra.mrb[0].mxu0 %v395
        %v478 = vpop.f32.mrb[0].mxu0
        %v479 = vadd.f32 0.0, %v478
        %v480 = vpop.f32.mrb[0].mxu0
        %v481 = vpop.f32.mrb[0].mxu0
        %v482 = vadd.f32 0.0, %v481
        %v483 = vpop.f32.mrb[0].mxu0
        %484 = vdwg.mxu0
        %v485 = vadd.f32 %v393, %v479
        %v486 = vadd.f32 %v394, %v482
        %vm487 = vcmask 130048
        %488 = vst.msk [vmem:[#allocation2] sm:$0xff] %vm487, %v485
        %489 = vst.msk [vmem:[#allocation2 + $0x8] sm:$0xff] %vm487, %v486
        %s490 = scalar_lea.vmem %s260, 32 [#allocation3]
        %v491 = vld [vmem:[%s490] sm:$0xff]
        %v492 = vld [vmem:[%s490 + $0x8] sm:$0xff]
        %v493 = vld [vmem:[%s490 + $0x10] sm:$0xff]
        %v494 = vld [vmem:[%s490 + $0x18] sm:$0xff]
        %v495 = vpack.c.bf16 %v492, %v491
        %v496 = vpack.c.bf16 %v494, %v493
        %497 = vmatprep.subr.bf16.mxu0 0
        %498 = vmatpush1.bf16.msra.mxu0 %v495
        %499 = vmatprep.subr.bf16.mxu0 0
        %500 = vmatpush1.bf16.msra.mxu0 %v496
        %501 = vmatprep.subr.bf16.mxu0 0
        %502 = vmatpush1.bf16.msra.mxu0 0
        %503 = vmatprep.subr.bf16.mxu0 0
        %504 = vmatpush1.bf16.msra.mxu0 0
        %505 = vmatprep.subr.bf16.mxu0 0
        %506 = vmatpush1.bf16.msra.mxu0 0
        %507 = vmatprep.subr.bf16.mxu0 0
        %508 = vmatpush1.bf16.msra.mxu0 0
        %509 = vmatprep.subr.bf16.mxu0 0
        %510 = vmatpush1.bf16.msra.mxu0 0
        %511 = vmatprep.subr.bf16.mxu0 0
        %512 = vmatpush1.bf16.msra.mxu0 0
        %513 = vmatprep.subr.bf16.mxu0 0
        %514 = vmatpush1.bf16.msra.mxu0 0
        %515 = vmatprep.subr.bf16.mxu0 0
        %516 = vmatpush1.bf16.msra.mxu0 0
        %517 = vmatprep.subr.bf16.mxu0 0
        %518 = vmatpush1.bf16.msra.mxu0 0
        %519 = vmatprep.subr.bf16.mxu0 0
        %520 = vmatpush1.bf16.msra.mxu0 0
        %521 = vmatprep.subr.bf16.mxu0 0
        %522 = vmatpush1.bf16.msra.mxu0 0
        %523 = vmatprep.subr.bf16.mxu0 0
        %524 = vmatpush1.bf16.msra.mxu0 0
        %525 = vmatprep.subr.bf16.mxu0 0
        %526 = vmatpush1.bf16.msra.mxu0 0
        %527 = vmatprep.subr.bf16.mxu0 0
        %528 = vmatpush1.bf16.msra.mxu0 0
        %529 = vmatprep.mubr.bf16.mxu0 0
        %530 = vmatmul.mubr.bf16.gmra.mrb[0].mxu0 %v350
        %v531 = vpop.f32.mrb[0].mxu0
        %v532 = vadd.f32 0.0, %v531
        %v533 = vpop.f32.mrb[0].mxu0
        %v534 = vpop.f32.mrb[0].mxu0
        %v535 = vadd.f32 0.0, %v534
        %v536 = vpop.f32.mrb[0].mxu0
        %537 = vdwg.mxu0
        %s538 = scalar_lea.vmem [#allocation2], 16
        %v539 = vld [vmem:[%s538] sm:$0xff]
        %v540 = vld [vmem:[%s538 + $0x8] sm:$0xff]
        %v541 = vpack.c.bf16 %v535, %v532
        %542 = vmatprep.subr.bf16.mxu0 0
        %543 = vmatpush1.bf16.msra.mxu0 %v428
        %544 = vmatprep.subr.bf16.mxu0 0
        %545 = vmatpush1.bf16.msra.mxu0 %v429
        %546 = vmatprep.subr.bf16.mxu0 0
        %547 = vmatpush1.bf16.msra.mxu0 %v430
        %548 = vmatprep.subr.bf16.mxu0 0
        %549 = vmatpush1.bf16.msra.mxu0 %v431
        %550 = vmatprep.subr.bf16.mxu0 0
        %551 = vmatpush1.bf16.msra.mxu0 %v432
        %552 = vmatprep.subr.bf16.mxu0 0
        %553 = vmatpush1.bf16.msra.mxu0 %v433
        %554 = vmatprep.subr.bf16.mxu0 0
        %555 = vmatpush1.bf16.msra.mxu0 %v434
        %556 = vmatprep.subr.bf16.mxu0 0
        %557 = vmatpush1.bf16.msra.mxu0 %v435
        %558 = vmatprep.subr.bf16.mxu0 0
        %559 = vmatpush1.bf16.msra.mxu0 0
        %560 = vmatprep.subr.bf16.mxu0 0
        %561 = vmatpush1.bf16.msra.mxu0 0
        %562 = vmatprep.subr.bf16.mxu0 0
        %563 = vmatpush1.bf16.msra.mxu0 0
        %564 = vmatprep.subr.bf16.mxu0 0
        %565 = vmatpush1.bf16.msra.mxu0 0
        %566 = vmatprep.subr.bf16.mxu0 0
        %567 = vmatpush1.bf16.msra.mxu0 0
        %568 = vmatprep.subr.bf16.mxu0 0
        %569 = vmatpush1.bf16.msra.mxu0 0
        %570 = vmatprep.subr.bf16.mxu0 0
        %571 = vmatpush1.bf16.msra.mxu0 0
        %572 = vmatprep.subr.bf16.mxu0 0
        %573 = vmatpush1.bf16.msra.mxu0 0
        %574 = vmatprep.mubr.bf16.mxu0 0
        %575 = vmatmul.mubr.bf16.gmra.mrb[0].mxu0 %v541
        %v576 = vpop.f32.mrb[0].mxu0
        %v577 = vadd.f32 0.0, %v576
        %v578 = vpop.f32.mrb[0].mxu0
        %v579 = vpop.f32.mrb[0].mxu0
        %v580 = vadd.f32 0.0, %v579
        %v581 = vpop.f32.mrb[0].mxu0
        %582 = vdwg.mxu0
        %v583 = vadd.f32 %v539, %v577
        %v584 = vadd.f32 %v540, %v580
        %585 = vst.msk [vmem:[%s538] sm:$0xff] %vm487, %v583
        %586 = vst.msk [vmem:[%s538 + $0x8] sm:$0xff] %vm487, %v584
        %s587 = scalar_lea.vmem %s260, 64 [#allocation3]
        %v588 = vld [vmem:[%s587] sm:$0xff]
        %v589 = vld [vmem:[%s587 + $0x8] sm:$0xff]
        %v590 = vld [vmem:[%s587 + $0x10] sm:$0xff]
        %v591 = vld [vmem:[%s587 + $0x18] sm:$0xff]
        %v592 = vpack.c.bf16 %v589, %v588
        %v593 = vpack.c.bf16 %v591, %v590
        %594 = vmatprep.subr.bf16.mxu0 0
        %595 = vmatpush1.bf16.msra.mxu0 %v592
        %596 = vmatprep.subr.bf16.mxu0 0
        %597 = vmatpush1.bf16.msra.mxu0 %v593
        %598 = vmatprep.subr.bf16.mxu0 0
        %599 = vmatpush1.bf16.msra.mxu0 0
        %600 = vmatprep.subr.bf16.mxu0 0
        %601 = vmatpush1.bf16.msra.mxu0 0
        %602 = vmatprep.subr.bf16.mxu0 0
        %603 = vmatpush1.bf16.msra.mxu0 0
        %604 = vmatprep.subr.bf16.mxu0 0
        %605 = vmatpush1.bf16.msra.mxu0 0
        %606 = vmatprep.subr.bf16.mxu0 0
        %607 = vmatpush1.bf16.msra.mxu0 0
        %608 = vmatprep.subr.bf16.mxu0 0
        %609 = vmatpush1.bf16.msra.mxu0 0
        %610 = vmatprep.subr.bf16.mxu0 0
        %611 = vmatpush1.bf16.msra.mxu0 0
        %612 = vmatprep.subr.bf16.mxu0 0
        %613 = vmatpush1.bf16.msra.mxu0 0
        %614 = vmatprep.subr.bf16.mxu0 0
        %615 = vmatpush1.bf16.msra.mxu0 0
        %616 = vmatprep.subr.bf16.mxu0 0
        %617 = vmatpush1.bf16.msra.mxu0 0
        %618 = vmatprep.subr.bf16.mxu0 0
        %619 = vmatpush1.bf16.msra.mxu0 0
        %620 = vmatprep.subr.bf16.mxu0 0
        %621 = vmatpush1.bf16.msra.mxu0 0
        %622 = vmatprep.subr.bf16.mxu0 0
        %623 = vmatpush1.bf16.msra.mxu0 0
        %624 = vmatprep.subr.bf16.mxu0 0
        %625 = vmatpush1.bf16.msra.mxu0 0
        %626 = vmatprep.mubr.bf16.mxu0 0
        %627 = vmatmul.mubr.bf16.gmra.mrb[0].mxu0 %v350
        %v628 = vpop.f32.mrb[0].mxu0
        %v629 = vadd.f32 0.0, %v628
        %v630 = vpop.f32.mrb[0].mxu0
        %v631 = vpop.f32.mrb[0].mxu0
        %v632 = vadd.f32 0.0, %v631
        %v633 = vpop.f32.mrb[0].mxu0
        %634 = vdwg.mxu0
        %s635 = scalar_lea.vmem [#allocation2], 32
        %v636 = vld [vmem:[%s635] sm:$0xff]
        %v637 = vld [vmem:[%s635 + $0x8] sm:$0xff]
        %v638 = vpack.c.bf16 %v632, %v629
        %639 = vmatprep.subr.bf16.mxu0 0
        %640 = vmatpush1.bf16.msra.mxu0 %v428
        %641 = vmatprep.subr.bf16.mxu0 0
        %642 = vmatpush1.bf16.msra.mxu0 %v429
        %643 = vmatprep.subr.bf16.mxu0 0
        %644 = vmatpush1.bf16.msra.mxu0 %v430
        %645 = vmatprep.subr.bf16.mxu0 0
        %646 = vmatpush1.bf16.msra.mxu0 %v431
        %647 = vmatprep.subr.bf16.mxu0 0
        %648 = vmatpush1.bf16.msra.mxu0 %v432
        %649 = vmatprep.subr.bf16.mxu0 0
        %650 = vmatpush1.bf16.msra.mxu0 %v433
        %651 = vmatprep.subr.bf16.mxu0 0
        %652 = vmatpush1.bf16.msra.mxu0 %v434
        %653 = vmatprep.subr.bf16.mxu0 0
        %654 = vmatpush1.bf16.msra.mxu0 %v435
        %655 = vmatprep.subr.bf16.mxu0 0
        %656 = vmatpush1.bf16.msra.mxu0 0
        %657 = vmatprep.subr.bf16.mxu0 0
        %658 = vmatpush1.bf16.msra.mxu0 0
        %659 = vmatprep.subr.bf16.mxu0 0
        %660 = vmatpush1.bf16.msra.mxu0 0
        %661 = vmatprep.subr.bf16.mxu0 0
        %662 = vmatpush1.bf16.msra.mxu0 0
        %663 = vmatprep.subr.bf16.mxu0 0
        %664 = vmatpush1.bf16.msra.mxu0 0
        %665 = vmatprep.subr.bf16.mxu0 0
        %666 = vmatpush1.bf16.msra.mxu0 0
        %667 = vmatprep.subr.bf16.mxu0 0
        %668 = vmatpush1.bf16.msra.mxu0 0
        %669 = vmatprep.subr.bf16.mxu0 0
        %670 = vmatpush1.bf16.msra.mxu0 0
        %671 = vmatprep.mubr.bf16.mxu0 0
        %672 = vmatmul.mubr.bf16.gmra.mrb[0].mxu0 %v638
        %v673 = vpop.f32.mrb[0].mxu0
        %v674 = vadd.f32 0.0, %v673
        %v675 = vpop.f32.mrb[0].mxu0
        %v676 = vpop.f32.mrb[0].mxu0
        %v677 = vadd.f32 0.0, %v676
        %v678 = vpop.f32.mrb[0].mxu0
        %679 = vdwg.mxu0
        %v680 = vadd.f32 %v636, %v674
        %v681 = vadd.f32 %v637, %v677
        %682 = vst.msk [vmem:[%s635] sm:$0xff] %vm487, %v680
        %683 = vst.msk [vmem:[%s635 + $0x8] sm:$0xff] %vm487, %v681
        // Predicated region
        $region57: #{tpu_custom_call.1} parent=39 // pred_check
          %p684 = pneg %p308
        $region58: #{tpu_custom_call.1} parent=39 // pred_check_branch
          %686 = sbr.rel (%p684) target = $region60
        $region59: #{tpu_custom_call.1} parent=39 // pred_region
          %v687 = vld [vmem:[#allocation2] sm:$0xff]
          %v688 = vld [vmem:[#allocation2 + $0x8] sm:$0xff]
          %s689 = sld [smem:[#allocation7]]
          %v690 = vstv %s689
          %v691 = vsub.f32 %v687, %v690
          %v692 = vsub.f32 %v688, %v690
          %s693 = sld [smem:[#allocation8]]
          %v694 = vstv %s693
          %v695 = vmul.f32 %v691, %v694
          %v696 = vmul.f32 %v692, %v694
          %697 = vst.msk [vmem:[%s300] sm:$0xff] %vm487, %v695
          %698 = vst.msk [vmem:[%s300 + $0x8] sm:$0xff] %vm487, %v696
          %v699 = vld [vmem:[%s538] sm:$0xff]
          %v700 = vld [vmem:[%s538 + $0x8] sm:$0xff]
          %s701 = sld [smem:[#allocation7 + $0x1]]
          %v702 = vstv %s701
          %v703 = vsub.f32 %v699, %v702
          %v704 = vsub.f32 %v700, %v702
          %s705 = sld [smem:[#allocation8 + $0x1]]
          %v706 = vstv %s705
          %v707 = vmul.f32 %v703, %v706
          %v708 = vmul.f32 %v704, %v706
          %s709 = scalar_lea.vmem %s300, 16 [#allocation10]
          %710 = vst.msk [vmem:[%s709] sm:$0xff] %vm487, %v707
          %711 = vst.msk [vmem:[%s709 + $0x8] sm:$0xff] %vm487, %v708
          %v712 = vld [vmem:[%s635] sm:$0xff]
          %v713 = vld [vmem:[%s635 + $0x8] sm:$0xff]
          %s714 = sld [smem:[#allocation7 + $0x2]]
          %v715 = vstv %s714
          %v716 = vsub.f32 %v712, %v715
          %v717 = vsub.f32 %v713, %v715
          %s718 = sld [smem:[#allocation8 + $0x2]]
          %v719 = vstv %s718
          %v720 = vmul.f32 %v716, %v719
          %v721 = vmul.f32 %v717, %v719
          %s722 = scalar_lea.vmem %s300, 32 [#allocation10]
          %723 = vst.msk [vmem:[%s722] sm:$0xff] %vm487, %v720
          %724 = vst.msk [vmem:[%s722 + $0x8] sm:$0xff] %vm487, %v721
        $region60: #{tpu_custom_call.1} parent=39 // pred_fallthru
          _
        %s725 = sand.u32 %s161, 1
        %s726 = scalar_lea.sflag [#allocation5], %s725
        %s727 = sand.u32 %s161, 1
        %s728 = smul.addr %s727, 48
        %s729 = scalar_lea.vmem [#allocation10], %s728
        // Predicated region
        $region61: #{tpu_custom_call.1} parent=39 // pred_check
          %p730 = pneg %p171
        $region62: #{tpu_custom_call.1} parent=39 // pred_check_branch
          %732 = sbr.rel (%p730) target = $region64
        $region63: #{tpu_custom_call.1} parent=39 // pred_region
          %s734 = ssub.s32 768, 768
          %735 = vsyncadd %s726, %s734
          %s736 = smul.addr %s28, 6
          %s737 = smul.addr %s736, 128
          %s738 = scalar_lea.hbm %s5, %s737
          %s739 = sshll.u32 %s729, 4
          %s740 = int_to_ptr.vmem [resolvable:$true] %s739
          %745 = dma.vmem_to_hbm [thread:$0]  %s740, 768, %s738, %s726, 128, 128, 8
        $region64: #{tpu_custom_call.1} parent=39 // pred_fallthru
          _
      $region40: #{tpu_custom_call.1} parent=5 // pred_fallthru
        _
      %p746 = scmp.le.s32.totalorder 2, %s19
      // Predicated region
      $region65: #{tpu_custom_call.1} parent=5 // pred_check
        %p747 = pneg %p746
      $region66: #{tpu_custom_call.1} parent=5 // pred_check_branch
        %749 = sbr.rel (%p747) target = $region68
      $region67: #{tpu_custom_call.1} parent=5 // pred_region
        %s750 = ssub.s32 %s19, 2
        // Predicated region
        $region69: #{tpu_custom_call.1} parent=67 // pred_check
          %p751 = pneg %p177
        $region70: #{tpu_custom_call.1} parent=67 // pred_check_branch
          %753 = sbr.rel (%p751) target = $region72
        $region71: #{tpu_custom_call.1} parent=67 // pred_region
          %s754 = sand.u32 %s162, 1
          %s755 = scalar_lea.sflag [#allocation5], %s754
          %s756 = sand.u32 %s162, 1
          %s757 = smul.addr %s756, 48
          %s758 = scalar_lea.vmem [#allocation10], %s757
          %759 = dma.done %s755, 768
        $region72: #{tpu_custom_call.1} parent=67 // pred_fallthru
          _
      $region68: #{tpu_custom_call.1} parent=5 // pred_fallthru
        _
    $region6: #{tpu_custom_call.1} parent=1 // loop_footer
      %s23 = sadd.s32 1, %s19
    $region7: #{tpu_custom_call.1} parent=1 // loop_footer_branch
      %18 = sbr.rel target = $region3
    $region8: #{tpu_custom_call.1} parent=1 // loop_exit
      _
    %760 = vsyncpa [#allocation4], 1
    %s761 = scalar_lea.sflag [#allocation4], 1
    %762 = vsyncpa %s761, 1
    %763 = vsyncpa [#allocation5], 1
    %s764 = scalar_lea.sflag [#allocation5], 1
    %765 = vsyncpa %s764, 1
    %766 = vsyncpa [#allocation6], 1
    %s767 = scalar_lea.sflag [#allocation6], 1
    %768 = vsyncpa %s767, 1
    %769 = vsyncpa [#allocation9], 1

</llo_original>
